<compile_context>
chip_gen: v7x
topology: tpu7x:2x2x1
jax: 0.10.0
libtpu: 0.0.40
codegen_flags: <defaults>
</compile_context>

<pallas_src>
import functools

import jax
import jax.numpy as jnp
from jax.experimental import pallas as pl
from jax.experimental.pallas import tpu as pltpu


def _round_up(n, m):
    return ((n + m - 1) // m) * m


def _pad2d(a, rows, cols):
    r, c = a.shape
    if r == rows and c == cols:
        return a
    return jnp.pad(a, ((0, rows - r), (0, cols - c)))


# ---------------------------------------------------------------------------
# Kernels
# ---------------------------------------------------------------------------
def _actnorm_fwd_kernel(x_ref, s_ref, t_ref, z_ref):
    """Steady-state affine on one (TB, Dp) batch tile: z = x * exp(s) + t."""
    x = x_ref[...].astype(jnp.float32)           # (TB, Dp)
    s = s_ref[...].astype(jnp.float32)           # (1, Dp)
    t = t_ref[...].astype(jnp.float32)           # (1, Dp)
    # exp() uses the EUP slot, which is idle in this mem-bound kernel (free).
    z_ref[...] = (x * jnp.exp(s) + t).astype(z_ref.dtype)


def _actnorm_init_kernel(x_ref, s_ref, t_ref, sum_acc, sq_acc, *, batch_size):
    """Data-dependent init: tiled sum / sum-of-squares reduction over batch."""
    i = pl.program_id(0)

    @pl.when(i == 0)
    def _():
        sum_acc[...] = jnp.zeros_like(sum_acc)
        sq_acc[...] = jnp.zeros_like(sq_acc)

    x = x_ref[...].astype(jnp.float32)           # (TB, Dp); padded rows are 0
    sum_acc[...] += jnp.sum(x, axis=0, keepdims=True)
    sq_acc[...] += jnp.sum(x * x, axis=0, keepdims=True)

    @pl.when(i == pl.num_programs(0) - 1)
    def _():
        n = jnp.float32(batch_size)              # true (unpadded) batch size
        mean = sum_acc[...] / n
        # Unbiased (ddof=1) variance, matching torch.std(dim=0).
        var = (sq_acc[...] - n * mean * mean) / (n - 1.0)
        var = jnp.maximum(var, 0.0)              # guard tiny negative residue
        s = -0.5 * jnp.log(var)                  # == -log(sqrt(var))
        # mean(x * exp(s), axis=0) == exp(s) * mean(x, axis=0)  (s is per-col)
        t = -jnp.exp(s) * mean
        s_ref[...] = s
        t_ref[...] = t


# ---------------------------------------------------------------------------
# pallas_call wrappers
# ---------------------------------------------------------------------------
# Batch-tile size.  256 rows x Dp lanes of f32, double-buffered in + out, stays
# well under the 32 MiB scoped-VMEM default on every generation (v7x: 64 MiB
# physical; v5e/v6e: 128 MiB).  Bump toward 512-1024 on v5e/v6e with large D
# if chasing the HBM roofline; keep smaller on v7x.
_DEFAULT_BLOCK_B = 256


@functools.partial(jax.jit, static_argnames=("block_b",))
def actnorm_forward(x, s, t, block_b=_DEFAULT_BLOCK_B):
    """z = x * exp(s) + t via a batch-tiled Pallas kernel; log_det in plain JAX."""
    b, d = x.shape
    d_pad = _round_up(d, 128)                    # lane-dense last dim
    tb = min(block_b, _round_up(b, 8))           # sublane-aligned batch tile
    b_pad = _round_up(b, tb)

    xp = _pad2d(x, b_pad, d_pad)
    sp = _pad2d(s, 1, d_pad)                     # zero-pad: exp(0)=1, +0
    tp = _pad2d(t, 1, d_pad)

    zp = pl.pallas_call(
        _actnorm_fwd_kernel,
        grid=(b_pad // tb,),
        in_specs=[
            pl.BlockSpec((tb, d_pad), lambda i: (i, 0)),
            pl.BlockSpec((1, d_pad), lambda i: (0, 0)),
            pl.BlockSpec((1, d_pad), lambda i: (0, 0)),
        ],
        out_specs=pl.BlockSpec((tb, d_pad), lambda i: (i, 0)),
        out_shape=jax.ShapeDtypeStruct((b_pad, d_pad), x.dtype),
        compiler_params=pltpu.CompilerParams(
            dimension_semantics=("parallel",)),
    )(xp, sp, tp)

    z = zp[:b, :d]
    # log_det depends only on the (1, D) parameter s -> hoisted out of the
    # hot path (drops an XLU cross-lane reduce + masked (1,1) store per call).
    log_det = jnp.sum(s, axis=1)
    return z, log_det


@functools.partial(jax.jit, static_argnames=("block_b",))
def actnorm_init_params(x, block_b=_DEFAULT_BLOCK_B):
    """Data-dependent (s, t) via a tiled batch reduction (whole batch never resident)."""
    b, d = x.shape
    d_pad = _round_up(d, 128)
    tb = min(block_b, _round_up(b, 8))
    b_pad = _round_up(b, tb)
    xp = _pad2d(x.astype(jnp.float32), b_pad, d_pad)

    sp, tp = pl.pallas_call(
        functools.partial(_actnorm_init_kernel, batch_size=b),
        grid=(b_pad // tb,),
        in_specs=[pl.BlockSpec((tb, d_pad), lambda i: (i, 0))],
        out_specs=[
            pl.BlockSpec((1, d_pad), lambda i: (0, 0)),
            pl.BlockSpec((1, d_pad), lambda i: (0, 0)),
        ],
        out_shape=(
            jax.ShapeDtypeStruct((1, d_pad), jnp.float32),
            jax.ShapeDtypeStruct((1, d_pad), jnp.float32),
        ),
        scratch_shapes=[
            pltpu.VMEM((1, d_pad), jnp.float32),
            pltpu.VMEM((1, d_pad), jnp.float32),
        ],
        compiler_params=pltpu.CompilerParams(
            dimension_semantics=("arbitrary",)),   # batch axis is a reduction
    )(xp)

    return sp[:, :d], tp[:, :d]


# ---------------------------------------------------------------------------
# Module-like wrapper mirroring ActNorm's stateful behavior
# ---------------------------------------------------------------------------
class ActNorm:
    def __init__(self, dim, key):
        ks, kt = jax.random.split(key)
        # nn.Parameter(torch.randn(1, dim)); overwritten by the data-dependent
        # init on the very first forward, exactly like the PyTorch module.
        self.s = jax.random.normal(ks, (1, dim), dtype=jnp.float32)
        self.t = jax.random.normal(kt, (1, dim), dtype=jnp.float32)
        self.data_dep_init_done = False

    def forward(self, x):
        if not self.data_dep_init_done:
            self.s, self.t = actnorm_init_params(x)
            self.data_dep_init_done = True
        return actnorm_forward(x, self.s, self.t)


# ---------------------------------------------------------------------------
# Pure-JAX reference for verification
# ---------------------------------------------------------------------------
def _ref_first_forward(x):
    std = jnp.sqrt(jnp.var(x, axis=0, keepdims=True, ddof=1))
    s = -jnp.log(std)
    t = -jnp.mean(x * jnp.exp(s), axis=0, keepdims=True)
    z = x * jnp.exp(s) + t
    log_det = jnp.sum(s, axis=1)
    return z, log_det, s, t


if __name__ == "__main__":
    key = jax.random.PRNGKey(0)
    k_param, k_x, k_x2 = jax.random.split(key, 3)

    B, D = 8, 32
    x = jax.random.normal(k_x, (B, D), dtype=jnp.float32) * 3.0 + 1.5

    flow = ActNorm(D, k_param)

    # First call: data-dependent init (tiled reduction kernel) + affine kernel.
    z, log_det = flow.forward(x)
    jax.block_until_ready((z, log_det))

    z_ref, ld_ref, s_ref, t_ref = _ref_first_forward(x)
    assert jnp.allclose(flow.s, s_ref, atol=1e-5, rtol=1e-5)
    assert jnp.allclose(flow.t, t_ref, atol=1e-5, rtol=1e-5)
    assert jnp.allclose(z, z_ref, atol=1e-5, rtol=1e-5)
    assert jnp.allclose(log_det, ld_ref, atol=1e-5, rtol=1e-5)

    # Second call: steady-state path using the stored (s, t).
    x2 = jax.random.normal(k_x2, (B, D), dtype=jnp.float32)
    z2, log_det2 = flow.forward(x2)
    jax.block_until_ready((z2, log_det2))

    assert jnp.allclose(z2, x2 * jnp.exp(flow.s) + flow.t, atol=1e-5, rtol=1e-5)
    assert jnp.allclose(log_det2, jnp.sum(flow.s, axis=1), atol=1e-5, rtol=1e-5)

    print("KERNEL_OK")
</pallas_src>

<mosaic_0001>
module attributes {stable_mosaic.version = 11 : i64} {
  func.func @_actnorm_init_kernel(%arg0: i32, %arg1: memref<8x128xf32, #tpu.memory_space<vmem>>, %arg2: memref<1x128xf32, #tpu.memory_space<vmem>>, %arg3: memref<1x128xf32, #tpu.memory_space<vmem>>, %arg4: memref<1x128xf32, #tpu.memory_space<vmem>>, %arg5: memref<1x128xf32, #tpu.memory_space<vmem>>) attributes {dimension_semantics = [#tpu.dimension_semantics<arbitrary>], iteration_bounds = array<i64: 1>, scalar_prefetch = 0 : i64, scratch_operands = 2 : i64, tpu.core_type = #tpu.core_type<tc>, window_params = [{transform_indices = @transform_0, window_bounds = array<i64: 8, 128>}, {pipeline_mode = #tpu.pipeline_mode<synchronous>, transform_indices = @transform_1, window_bounds = array<i64: 1, 128>}, {pipeline_mode = #tpu.pipeline_mode<synchronous>, transform_indices = @transform_2, window_bounds = array<i64: 1, 128>}]} {
    %c0_i32 = arith.constant 0 : i32
    %0 = arith.cmpi eq, %arg0, %c0_i32 : i32
    %1 = arith.extui %0 : i1 to i32
    %c0_i32_0 = arith.constant 0 : i32
    %2 = arith.cmpi ne, %1, %c0_i32_0 : i32
    scf.if %2 {
      %cst_13 = arith.constant 0.000000e+00 : f32
      %18 = vector.broadcast %cst_13 : f32 to vector<1x128xf32>
      %c0_14 = arith.constant 0 : index
      %c0_15 = arith.constant 0 : index
      %19 = vector.load %arg4[%c0_14, %c0_15] : memref<1x128xf32, #tpu.memory_space<vmem>>, vector<1x128xf32>
      tpu.vector_store %arg4[%c0_14, %c0_15], %18 {strides = array<i32>} : memref<1x128xf32, #tpu.memory_space<vmem>>, vector<1x128xf32>,
      %cst_16 = arith.constant 0.000000e+00 : f32
      %20 = vector.broadcast %cst_16 : f32 to vector<1x128xf32>
      %c0_17 = arith.constant 0 : index
      %c0_18 = arith.constant 0 : index
      %21 = vector.load %arg5[%c0_17, %c0_18] : memref<1x128xf32, #tpu.memory_space<vmem>>, vector<1x128xf32>
      tpu.vector_store %arg5[%c0_17, %c0_18], %20 {strides = array<i32>} : memref<1x128xf32, #tpu.memory_space<vmem>>, vector<1x128xf32>,
    } else {
    }
    %c0 = arith.constant 0 : index
    %c0_1 = arith.constant 0 : index
    %3 = vector.load %arg1[%c0, %c0_1] : memref<8x128xf32, #tpu.memory_space<vmem>>, vector<8x128xf32>
    %c0_2 = arith.constant 0 : index
    %c0_3 = arith.constant 0 : index
    %4 = vector.load %arg4[%c0_2, %c0_3] : memref<1x128xf32, #tpu.memory_space<vmem>>, vector<1x128xf32>
    %cst = arith.constant dense<0.000000e+00> : vector<128xf32>
    %5 = vector.multi_reduction <add>, %3, %cst [0] : vector<8x128xf32> to vector<128xf32>
    %6 = vector.shape_cast %5 : vector<128xf32> to vector<1x128xf32>
    %7 = arith.addf %4, %6 : vector<1x128xf32>
    %c0_4 = arith.constant 0 : index
    %c0_5 = arith.constant 0 : index
    %8 = vector.load %arg4[%c0_4, %c0_5] : memref<1x128xf32, #tpu.memory_space<vmem>>, vector<1x128xf32>
    tpu.vector_store %arg4[%c0_4, %c0_5], %7 {strides = array<i32>} : memref<1x128xf32, #tpu.memory_space<vmem>>, vector<1x128xf32>,
    %c0_6 = arith.constant 0 : index
    %c0_7 = arith.constant 0 : index
    %9 = vector.load %arg5[%c0_6, %c0_7] : memref<1x128xf32, #tpu.memory_space<vmem>>, vector<1x128xf32>
    %10 = arith.mulf %3, %3 : vector<8x128xf32>
    %cst_8 = arith.constant dense<0.000000e+00> : vector<128xf32>
    %11 = vector.multi_reduction <add>, %10, %cst_8 [0] : vector<8x128xf32> to vector<128xf32>
    %12 = vector.shape_cast %11 : vector<128xf32> to vector<1x128xf32>
    %13 = arith.addf %9, %12 : vector<1x128xf32>
    %c0_9 = arith.constant 0 : index
    %c0_10 = arith.constant 0 : index
    %14 = vector.load %arg5[%c0_9, %c0_10] : memref<1x128xf32, #tpu.memory_space<vmem>>, vector<1x128xf32>
    tpu.vector_store %arg5[%c0_9, %c0_10], %13 {strides = array<i32>} : memref<1x128xf32, #tpu.memory_space<vmem>>, vector<1x128xf32>,
    %c0_i32_11 = arith.constant 0 : i32
    %15 = arith.cmpi eq, %arg0, %c0_i32_11 : i32
    %16 = arith.extui %15 : i1 to i32
    %c0_i32_12 = arith.constant 0 : i32
    %17 = arith.cmpi ne, %16, %c0_i32_12 : i32
    scf.if %17 {
      %c0_13 = arith.constant 0 : index
      %c0_14 = arith.constant 0 : index
      %18 = vector.load %arg4[%c0_13, %c0_14] : memref<1x128xf32, #tpu.memory_space<vmem>>, vector<1x128xf32>
      %cst_15 = arith.constant 8.000000e+00 : f32
      %19 = vector.broadcast %cst_15 : f32 to vector<1x128xf32>
      %20 = arith.divf %18, %19 : vector<1x128xf32>
      %c0_16 = arith.constant 0 : index
      %c0_17 = arith.constant 0 : index
      %21 = vector.load %arg5[%c0_16, %c0_17] : memref<1x128xf32, #tpu.memory_space<vmem>>, vector<1x128xf32>
      %cst_18 = arith.constant 8.000000e+00 : f32
      %22 = vector.broadcast %cst_18 : f32 to vector<1x128xf32>
      %23 = arith.mulf %22, %20 : vector<1x128xf32>
      %24 = arith.mulf %23, %20 : vector<1x128xf32>
      %25 = arith.subf %21, %24 : vector<1x128xf32>
      %cst_19 = arith.constant 8.000000e+00 : f32
      %cst_20 = arith.constant 1.000000e+00 : f32
      %26 = arith.subf %cst_19, %cst_20 : f32
      %27 = vector.broadcast %26 : f32 to vector<1x128xf32>
      %28 = arith.divf %25, %27 : vector<1x128xf32>
      %cst_21 = arith.constant 0.000000e+00 : f32
      %29 = vector.broadcast %cst_21 : f32 to vector<1x128xf32>
      %30 = arith.maximumf %28, %29 : vector<1x128xf32>
      %31 = math.log %30 : vector<1x128xf32>
      %cst_22 = arith.constant -5.000000e-01 : f32
      %32 = vector.broadcast %cst_22 : f32 to vector<1x128xf32>
      %33 = arith.mulf %32, %31 : vector<1x128xf32>
      %34 = math.exp %33 : vector<1x128xf32>
      %cst_23 = arith.constant 0.000000e+00 : f32
      %35 = vector.broadcast %cst_23 : f32 to vector<1x128xf32>
      %36 = arith.subf %35, %34 : vector<1x128xf32>
      %37 = arith.mulf %36, %20 : vector<1x128xf32>
      %c0_24 = arith.constant 0 : index
      %c0_25 = arith.constant 0 : index
      %38 = vector.load %arg2[%c0_24, %c0_25] : memref<1x128xf32, #tpu.memory_space<vmem>>, vector<1x128xf32>
      tpu.vector_store %arg2[%c0_24, %c0_25], %33 {strides = array<i32>} : memref<1x128xf32, #tpu.memory_space<vmem>>, vector<1x128xf32>,
      %c0_26 = arith.constant 0 : index
      %c0_27 = arith.constant 0 : index
      %39 = vector.load %arg3[%c0_26, %c0_27] : memref<1x128xf32, #tpu.memory_space<vmem>>, vector<1x128xf32>
      tpu.vector_store %arg3[%c0_26, %c0_27], %37 {strides = array<i32>} : memref<1x128xf32, #tpu.memory_space<vmem>>, vector<1x128xf32>,
    } else {
    }
    return
  }
  func.func @transform_0(%arg0: i32) -> (i32, i32) {
    %c0_i32 = arith.constant 0 : i32
    %c0_i32_0 = arith.constant 0 : i32
    return %arg0, %c0_i32 : i32, i32
  }
  func.func @transform_1(%arg0: i32) -> (i32, i32) {
    %c0_i32 = arith.constant 0 : i32
    %c0_i32_0 = arith.constant 0 : i32
    %c0_i32_1 = arith.constant 0 : i32
    return %c0_i32, %c0_i32_0 : i32, i32
  }
  func.func @transform_2(%arg0: i32) -> (i32, i32) {
    %c0_i32 = arith.constant 0 : i32
    %c0_i32_0 = arith.constant 0 : i32
    %c0_i32_1 = arith.constant 0 : i32
    return %c0_i32, %c0_i32_0 : i32, i32
  }
}

</mosaic_0001>

<llo_original>
// kernel: actnorm_init_params.1
$region0: #{actnorm_init_params.1}
  #allocation0 [shape = 'u32[]', space=smem, size = 0x4, offset = 0x4, fixed_abs, tag = 'smem constant byte address 0x4 - core index']
  #allocation1 [shape = 'u32[144,128]{1,0:T(1,128)}', space=vmem, size = 0x12000, scoped, tag = 'internal scratch']
  #allocation2 [shape = 'f32[1,128]{1,0:T(1,128)}', space=vmem, size = 0x200, scoped, tag = 'scratch operand']
  #allocation3 [shape = 'f32[1,128]{1,0:T(1,128)}', space=vmem, size = 0x200, scoped, tag = 'scratch operand']
  %s0 = inlined_call_operand.vmem [shape: f32[8,128], index: 0, kind: input, shape index: {}]
  %s1 = inlined_call_operand.hbm [shape: f32[1,128], index: 1, kind: output, shape index: {0}]
  %s2 = inlined_call_operand.hbm [shape: f32[1,128], index: 2, kind: output, shape index: {1}]
  %3 = xla_tuple %s1, %s2
  %s4 = sld [smem:[#allocation0]]
  $region30: #{actnorm_init_params.1} parent=0
    _
  %s6 = ssub.s32 1, %s4
  %s7 = scalar_select 0, %s6, %s4
  $region1: #{actnorm_init_params.1} parent=0
    #allocation4 [shape = 'u8[512]{0}', space=vmem, size = 0x400, scoped, tag = 'output window, operand 0, single buffered']
    #allocation5 [shape = 's32[1]{0}', space=sflag, size = 0x4, scoped, tag = 'scoped memory for actnorm_init_params.1']
    #allocation6 [shape = 'u8[512]{0}', space=vmem, size = 0x400, scoped, tag = 'output window, operand 1, single buffered']
    #allocation7 [shape = 's32[1]{0}', space=sflag, size = 0x4, scoped, tag = 'scoped memory for actnorm_init_params.1']
    %8 = vsyncpa [#allocation5], 0
    %9 = vsyncpa [#allocation7], 0
    // Predicated region
    $region2: #{actnorm_init_params.1} parent=1 // pred_check
      _
    $region3: #{actnorm_init_params.1} parent=1 // pred_check_branch
      %11 = sbr.rel (0) target = $region5
    $region4: #{actnorm_init_params.1} parent=1 // pred_region
      _
    $region5: #{actnorm_init_params.1} parent=1 // pred_fallthru
      _
    %p12 = scmp.eq.s32.totalorder 0, 0
    // Predicated region
    $region6: #{actnorm_init_params.1} parent=1 // pred_check
      %p13 = pneg %p12
    $region7: #{actnorm_init_params.1} parent=1 // pred_check_branch
      %15 = sbr.rel (%p13) target = $region9
    $region8: #{actnorm_init_params.1} parent=1 // pred_region
      %16 = vst [vmem:[#allocation2] sm:$0x1] 0.0
      %17 = vst [vmem:[#allocation3] sm:$0x1] 0.0
    $region9: #{actnorm_init_params.1} parent=1 // pred_fallthru
      _
    %v18 = vld [vmem:[%s0] sm:$0xff]
    %v19 = vld [vmem:[#allocation2] sm:$0x1]
    %v20 = vrot.slane %v18, 4
    %v21 = vadd.f32 %v18, %v20
    %v22 = vrot.slane %v21, 2
    %v23 = vadd.f32 %v21, %v22
    %v24 = vrot.slane %v23, 1
    %v25 = vadd.f32 %v23, %v24
    %v26 = vadd.f32 %v19, %v25
    %27 = vst [vmem:[#allocation2] sm:$0x1] %v26
    %v28 = vld [vmem:[#allocation3] sm:$0x1]
    %v29 = vmul.f32 %v18, %v18
    %v30 = vrot.slane %v29, 4
    %v31 = vadd.f32 %v29, %v30
    %v32 = vrot.slane %v31, 2
    %v33 = vadd.f32 %v31, %v32
    %v34 = vrot.slane %v33, 1
    %v35 = vadd.f32 %v33, %v34
    %v36 = vadd.f32 %v28, %v35
    %37 = vst [vmem:[#allocation3] sm:$0x1] %v36
    // Predicated region
    $region10: #{actnorm_init_params.1} parent=1 // pred_check
      %p38 = pneg %p12
    $region11: #{actnorm_init_params.1} parent=1 // pred_check_branch
      %40 = sbr.rel (%p38) target = $region13
    $region12: #{actnorm_init_params.1} parent=1 // pred_region
      %v41 = vld [vmem:[#allocation2] sm:$0x1]
      %v42 = vrcp.pop 8.0
      %v43 = vmul.f32 %v41, %v42
      %v44 = vld [vmem:[#allocation3] sm:$0x1]
      %v45 = vmul.f32 %v43, 8.0
      %v46 = vmul.f32 %v45, %v43
      %v47 = vsub.f32 %v44, %v46
      %v48 = vrcp.pop 7.0
      %v49 = vmul.f32 %v47, %v48
      %v50 = vmax.f32 %v49, 0.0
      %v51 = vlog2.pop %v50
      %v52 = vmul.f32 %v51, 0.6931472
      %v53 = vmul.f32 %v52, -0.5
      %v54 = vmul.f32 %v53, 1.442695
      %v55 = vpow.pop %v54
      %v56 = vsub.f32 0.0, %v55
      %v57 = vmul.f32 %v56, %v43
      %58 = vst [vmem:[#allocation4] sm:$0x1] %v53
      %59 = vst [vmem:[#allocation6] sm:$0x1] %v57
    $region13: #{actnorm_init_params.1} parent=1 // pred_fallthru
      _
    // Predicated region
    $region14: #{actnorm_init_params.1} parent=1 // pred_check
      _
    $region15: #{actnorm_init_params.1} parent=1 // pred_check_branch
      %61 = sbr.rel (0) target = $region17
    $region16: #{actnorm_init_params.1} parent=1 // pred_region
      %s63 = ssub.s32 16, 16
      %64 = vsyncadd [#allocation5], %s63
      %s66 = sshll.u32 [#allocation4], 4
      %s67 = int_to_ptr.vmem [resolvable:$true] %s66
      %69 = dma.vmem_to_hbm [thread:$0]  %s67, 16, %s1, [#allocation5]
    $region17: #{actnorm_init_params.1} parent=1 // pred_fallthru
      _
    // Predicated region
    $region18: #{actnorm_init_params.1} parent=1 // pred_check
      _
    $region19: #{actnorm_init_params.1} parent=1 // pred_check_branch
      %71 = sbr.rel (0) target = $region21
    $region20: #{actnorm_init_params.1} parent=1 // pred_region
      %s73 = ssub.s32 16, 16
      %74 = vsyncadd [#allocation7], %s73
      %s76 = sshll.u32 [#allocation6], 4
      %s77 = int_to_ptr.vmem [resolvable:$true] %s76
      %79 = dma.vmem_to_hbm [thread:$0]  %s77, 16, %s2, [#allocation7]
    $region21: #{actnorm_init_params.1} parent=1 // pred_fallthru
      _
    // Predicated region
    $region22: #{actnorm_init_params.1} parent=1 // pred_check
      _
    $region23: #{actnorm_init_params.1} parent=1 // pred_check_branch
      %81 = sbr.rel (0) target = $region25
    $region24: #{actnorm_init_params.1} parent=1 // pred_region
      %82 = dma.done [#allocation5], 16
    $region25: #{actnorm_init_params.1} parent=1 // pred_fallthru
      _
    // Predicated region
    $region26: #{actnorm_init_params.1} parent=1 // pred_check
      _
    $region27: #{actnorm_init_params.1} parent=1 // pred_check_branch
      %84 = sbr.rel (0) target = $region29
    $region28: #{actnorm_init_params.1} parent=1 // pred_region
      %85 = dma.done [#allocation7], 16
    $region29: #{actnorm_init_params.1} parent=1 // pred_fallthru
      _
    %86 = vsyncpa [#allocation5], 1
    %87 = vsyncpa [#allocation7], 1

</llo_original>
